<compile_context>
chip_gen: v7x
topology: tpu7x:2x2x1
jax: 0.10.0
libtpu: 0.0.40
codegen_flags: <defaults>
</compile_context>

<pallas_src>
import jax
import jax.numpy as jnp
from jax.experimental import pallas as pl
from jax.experimental.pallas import tpu as pltpu


def _lasso_kernel(x_ref, w_ref, b_ref, o_ref):
    # (TB, K) * (1, K) -> reduce lanes -> (TB, 1); add scalar bias from SMEM.
    prod = x_ref[...] * w_ref[...]
    o_ref[...] = jnp.sum(prod, axis=-1, keepdims=True) + b_ref[0, 0]


def lasso_forward(x, weight, bias, *, block_b=1024):
    """x: (B, 1, 75, 75) float32, weight: (1, 5625), bias: (1,). Returns (B, 1)."""
    B = x.shape[0]
    x_flat = x.reshape(B, -1).astype(jnp.float32)          # (B, 5625) -- glue reshape
    K = x_flat.shape[1]

    # Batch tiling (no padding; Pallas masks the ragged last block):
    #   tiny B      -> single full block (block == full-dim exemption),
    #   mid-size B  -> split into >= 2 blocks so both v7x TensorCores get work,
    #   large B     -> TB = block_b rows per block.
    if B <= 8:
        TB = B
    elif B <= block_b:
        TB = max(8, ((pl.cdiv(B, 2) + 7) // 8) * 8)
    else:
        TB = block_b
    num_blocks = pl.cdiv(B, TB)

    w_row = weight.reshape(1, K).astype(jnp.float32)        # (1, K), lane-dense, resident
    b_smem = bias.reshape(1, 1).astype(jnp.float32)         # scalar in SMEM

    out = pl.pallas_call(
        _lasso_kernel,
        out_shape=jax.ShapeDtypeStruct((B, 1), jnp.float32),
        grid=(num_blocks,),
        in_specs=[
            pl.BlockSpec((TB, K), lambda i: (i, 0)),               # x tile, pipelined
            pl.BlockSpec((1, K), lambda i: (0, 0)),                # weight row, resident
            pl.BlockSpec(memory_space=pltpu.MemorySpace.SMEM),     # bias scalar
        ],
        out_specs=pl.BlockSpec((TB, 1), lambda i: (i, 0)),
        compiler_params=pltpu.CompilerParams(
            dimension_semantics=("parallel",),
            vmem_limit_bytes=52 << 20,
        ),
        cost_estimate=pl.CostEstimate(
            flops=2 * B * K,
            transcendentals=0,
            bytes_accessed=B * K * 4 + K * 4 + B * 4,
        ),
    )(x_flat, w_row, b_smem)
    return out


def init_params(key, dim_input=75 * 75, dim_output=1):
    # Deterministic init mimicking nn.Linear default: U(-1/sqrt(fan_in), 1/sqrt(fan_in)).
    kw, kb = jax.random.split(key)
    bound = 1.0 / jnp.sqrt(jnp.float32(dim_input))
    weight = jax.random.uniform(kw, (dim_output, dim_input), jnp.float32, -bound, bound)
    bias = jax.random.uniform(kb, (dim_output,), jnp.float32, -bound, bound)
    return weight, bias


if __name__ == "__main__":
    key = jax.random.PRNGKey(0)
    kx, kp = jax.random.split(key)

    B = 2
    x = jax.random.normal(kx, (B, 1, 75, 75), jnp.float32)   # NCHW input
    weight, bias = init_params(kp)

    out = lasso_forward(x, weight, bias)
    out = jax.block_until_ready(out)

    # Pure-JAX reference check.
    ref = x.reshape(B, -1) @ weight.T + bias
    assert out.shape == (B, 1)
    assert jnp.allclose(out, ref, atol=1e-4, rtol=1e-4)

    # TODO(synk): regularization() and output_to_target() are training/eval
    # utilities, not part of forward(); intentionally not implemented in-kernel.

    print("KERNEL_OK")
</pallas_src>

<mosaic_0001>
module attributes {stable_mosaic.version = 11 : i64} {
  func.func @_lasso_kernel(%arg0: i32, %arg1: memref<2x5625xf32, #tpu.memory_space<vmem>>, %arg2: memref<1x5625xf32, #tpu.memory_space<vmem>>, %arg3: memref<1x1xf32, #tpu.memory_space<smem>>, %arg4: memref<2x1xf32, #tpu.memory_space<vmem>>) attributes {dimension_semantics = [#tpu.dimension_semantics<parallel>], iteration_bounds = array<i64: 1>, scalar_prefetch = 0 : i64, scratch_operands = 0 : i64, tpu.core_type = #tpu.core_type<tc>, window_params = [{transform_indices = @transform_0, window_bounds = array<i64: 2, 5625>}, {pipeline_mode = #tpu.pipeline_mode<synchronous>, transform_indices = @transform_1, window_bounds = array<i64: 1, 5625>}, {transform_indices = @transform_2, window_bounds = array<i64: 1, 1>}, {transform_indices = @transform_3, window_bounds = array<i64: 2, 1>}]} {
    %c0 = arith.constant 0 : index
    %c0_0 = arith.constant 0 : index
    %0 = vector.load %arg1[%c0, %c0_0] : memref<2x5625xf32, #tpu.memory_space<vmem>>, vector<2x5625xf32>
    %c0_1 = arith.constant 0 : index
    %c0_2 = arith.constant 0 : index
    %1 = vector.load %arg2[%c0_1, %c0_2] : memref<1x5625xf32, #tpu.memory_space<vmem>>, vector<1x5625xf32>
    %2 = vector.broadcast %1 : vector<1x5625xf32> to vector<2x5625xf32>
    %3 = arith.mulf %0, %2 : vector<2x5625xf32>
    %cst = arith.constant dense<0.000000e+00> : vector<2xf32>
    %4 = vector.multi_reduction <add>, %3, %cst [1] : vector<2x5625xf32> to vector<2xf32>
    %5 = vector.shape_cast %4 : vector<2xf32> to vector<2x1xf32>
    %c0_3 = arith.constant 0 : index
    %c0_4 = arith.constant 0 : index
    %6 = memref.load %arg3[%c0_3, %c0_4] : memref<1x1xf32, #tpu.memory_space<smem>>
    %7 = vector.broadcast %6 : f32 to vector<2x1xf32>
    %8 = arith.addf %5, %7 : vector<2x1xf32>
    %c0_5 = arith.constant 0 : index
    %c0_6 = arith.constant 0 : index
    %9 = vector.load %arg4[%c0_5, %c0_6] : memref<2x1xf32, #tpu.memory_space<vmem>>, vector<2x1xf32>
    tpu.vector_store %arg4[%c0_5, %c0_6], %8 {strides = array<i32>} : memref<2x1xf32, #tpu.memory_space<vmem>>, vector<2x1xf32>,
    return
  }
  func.func @transform_0(%arg0: i32) -> (i32, i32) {
    %c0_i32 = arith.constant 0 : i32
    %c0_i32_0 = arith.constant 0 : i32
    return %arg0, %c0_i32 : i32, i32
  }
  func.func @transform_1(%arg0: i32) -> (i32, i32) {
    %c0_i32 = arith.constant 0 : i32
    %c0_i32_0 = arith.constant 0 : i32
    %c0_i32_1 = arith.constant 0 : i32
    return %c0_i32, %c0_i32_0 : i32, i32
  }
  func.func @transform_2(%arg0: i32) -> (i32, i32) {
    %c0_i32 = arith.constant 0 : i32
    %c0_i32_0 = arith.constant 0 : i32
    %c0_i32_1 = arith.constant 0 : i32
    return %c0_i32, %c0_i32_0 : i32, i32
  }
  func.func @transform_3(%arg0: i32) -> (i32, i32) {
    %c0_i32 = arith.constant 0 : i32
    %c0_i32_0 = arith.constant 0 : i32
    return %arg0, %c0_i32 : i32, i32
  }
}

</mosaic_0001>

<llo_original>
// kernel: tpu_custom_call.1
$region0: #{tpu_custom_call.1}
  #allocation0 [shape = 'u32[]', space=smem, size = 0x4, offset = 0x4, fixed_abs, tag = 'smem constant byte address 0x4 - core index']
  #allocation1 [shape = 'u32[144,128]{1,0:T(1,128)}', space=vmem, size = 0x12000, scoped, tag = 'internal scratch']
  #allocation2 [shape = 'f32[1,1]{1,0:T(1,128)S(6)}', space=smem, size = 0x200, scoped, tag = 'scoped memory for tpu_custom_call.1']
  %s0 = inlined_call_operand.hbm [shape: f32[2,5625], index: 0, kind: input, shape index: {}]
  %s1 = inlined_call_operand.hbm [shape: f32[1,5625], index: 1, kind: input, shape index: {}]
  %s2 = inlined_call_operand.<no memory space> [shape: f32[1,1], index: 2, kind: input, shape index: {}]
  %s3 = inlined_call_operand.vmem [shape: f32[2,1], index: 3, kind: output, shape index: {}]
  %s4 = sld [smem:[#allocation0]]
  $region30: #{tpu_custom_call.1} parent=0
    _
  %s6 = ssub.s32 1, %s4
  %s7 = scalar_select 0, %s6, %s4
  %8 = sst [smem:[#allocation2]] %s2
  $region1: #{tpu_custom_call.1} parent=0
    #allocation3 [shape = 'u8[45056]{0}', space=vmem, size = 0xb000, scoped, tag = 'input window, operand 0, single buffered']
    #allocation4 [shape = 's32[1]{0}', space=sflag, size = 0x4, scoped, tag = 'scoped memory for tpu_custom_call.1']
    #allocation5 [shape = 'u8[22528]{0}', space=vmem, size = 0x5800, scoped, tag = 'input window, operand 1, single buffered']
    #allocation6 [shape = 's32[1]{0}', space=sflag, size = 0x4, scoped, tag = 'scoped memory for tpu_custom_call.1']
    %9 = vsyncpa [#allocation4], 0
    %10 = vsyncpa [#allocation6], 0
    // Predicated region
    $region2: #{tpu_custom_call.1} parent=1 // pred_check
      _
    $region3: #{tpu_custom_call.1} parent=1 // pred_check_branch
      %12 = sbr.rel (0) target = $region5
    $region4: #{tpu_custom_call.1} parent=1 // pred_region
      %s14 = ssub.s32 1408, 1408
      %15 = vsyncadd [#allocation4], %s14
      %s17 = sshll.u32 [#allocation3], 4
      %s18 = int_to_ptr.vmem [resolvable:$true] %s17
      %20 = dma.hbm_to_vmem [thread:$0]  %s0, 1408, %s18, [#allocation4]
    $region5: #{tpu_custom_call.1} parent=1 // pred_fallthru
      _
    // Predicated region
    $region6: #{tpu_custom_call.1} parent=1 // pred_check
      _
    $region7: #{tpu_custom_call.1} parent=1 // pred_check_branch
      %22 = sbr.rel (0) target = $region9
    $region8: #{tpu_custom_call.1} parent=1 // pred_region
      %s24 = ssub.s32 704, 704
      %25 = vsyncadd [#allocation6], %s24
      %s27 = sshll.u32 [#allocation5], 4
      %s28 = int_to_ptr.vmem [resolvable:$true] %s27
      %30 = dma.hbm_to_vmem [thread:$0]  %s1, 704, %s28, [#allocation6]
    $region9: #{tpu_custom_call.1} parent=1 // pred_fallthru
      _
    // Predicated region
    $region10: #{tpu_custom_call.1} parent=1 // pred_check
      _
    $region11: #{tpu_custom_call.1} parent=1 // pred_check_branch
      %32 = sbr.rel (0) target = $region13
    $region12: #{tpu_custom_call.1} parent=1 // pred_region
      _
    $region13: #{tpu_custom_call.1} parent=1 // pred_fallthru
      _
    // Predicated region
    $region14: #{tpu_custom_call.1} parent=1 // pred_check
      _
    $region15: #{tpu_custom_call.1} parent=1 // pred_check_branch
      %34 = sbr.rel (0) target = $region17
    $region16: #{tpu_custom_call.1} parent=1 // pred_region
      %35 = dma.done [#allocation4], 1408
    $region17: #{tpu_custom_call.1} parent=1 // pred_fallthru
      _
    // Predicated region
    $region18: #{tpu_custom_call.1} parent=1 // pred_check
      _
    $region19: #{tpu_custom_call.1} parent=1 // pred_check_branch
      %37 = sbr.rel (0) target = $region21
    $region20: #{tpu_custom_call.1} parent=1 // pred_region
      %38 = dma.done [#allocation6], 704
    $region21: #{tpu_custom_call.1} parent=1 // pred_fallthru
      _
    %v39 = vld [vmem:[#allocation3] sm:$0xff]
    %v40 = vld [vmem:[#allocation3 + $0x8] sm:$0xff]
    %v41 = vld [vmem:[#allocation3 + $0x10] sm:$0xff]
    %v42 = vld [vmem:[#allocation3 + $0x18] sm:$0xff]
    %v43 = vld [vmem:[#allocation3 + $0x20] sm:$0xff]
    %v44 = vld [vmem:[#allocation3 + $0x28] sm:$0xff]
    %v45 = vld [vmem:[#allocation3 + $0x30] sm:$0xff]
    %v46 = vld [vmem:[#allocation3 + $0x38] sm:$0xff]
    %v47 = vld [vmem:[#allocation3 + $0x40] sm:$0xff]
    %v48 = vld [vmem:[#allocation3 + $0x48] sm:$0xff]
    %v49 = vld [vmem:[#allocation3 + $0x50] sm:$0xff]
    %v50 = vld [vmem:[#allocation5] sm:$0xff]
    %v51 = vld [vmem:[#allocation5 + $0x8] sm:$0xff]
    %v52 = vld [vmem:[#allocation5 + $0x10] sm:$0xff]
    %v53 = vld [vmem:[#allocation5 + $0x18] sm:$0xff]
    %v54 = vld [vmem:[#allocation5 + $0x20] sm:$0xff]
    %v55 = vld [vmem:[#allocation5 + $0x28] sm:$0xf]
    %v62 = vlaneseq
    %v63 = vshrl.u32 %v62, 7
    %v64 = vsub.s32 0, %v63
    %v65 = vrot.slane %v50, %v64
    %v66 = vlaneseq
    %v67 = vshrl.u32 %v66, 7
    %v68 = vsub.s32 1, %v67
    %v69 = vrot.slane %v50, %v68
    %v70 = vlaneseq
    %v71 = vshrl.u32 %v70, 7
    %v72 = vsub.s32 2, %v71
    %v73 = vrot.slane %v50, %v72
    %v74 = vlaneseq
    %v75 = vshrl.u32 %v74, 7
    %v76 = vsub.s32 3, %v75
    %v77 = vrot.slane %v50, %v76
    %v78 = vlaneseq
    %v79 = vshrl.u32 %v78, 7
    %v80 = vsub.s32 4, %v79
    %v81 = vrot.slane %v50, %v80
    %v82 = vlaneseq
    %v83 = vshrl.u32 %v82, 7
    %v84 = vsub.s32 5, %v83
    %v85 = vrot.slane %v50, %v84
    %v86 = vlaneseq
    %v87 = vshrl.u32 %v86, 7
    %v88 = vsub.s32 6, %v87
    %v89 = vrot.slane %v50, %v88
    %v90 = vlaneseq
    %v91 = vshrl.u32 %v90, 7
    %v92 = vsub.s32 7, %v91
    %v93 = vrot.slane %v50, %v92
    %v94 = vlaneseq
    %v95 = vshrl.u32 %v94, 7
    %v96 = vsub.s32 0, %v95
    %v97 = vrot.slane %v51, %v96
    %v98 = vlaneseq
    %v99 = vshrl.u32 %v98, 7
    %v100 = vsub.s32 1, %v99
    %v101 = vrot.slane %v51, %v100
    %v102 = vlaneseq
    %v103 = vshrl.u32 %v102, 7
    %v104 = vsub.s32 2, %v103
    %v105 = vrot.slane %v51, %v104
    %v106 = vlaneseq
    %v107 = vshrl.u32 %v106, 7
    %v108 = vsub.s32 3, %v107
    %v109 = vrot.slane %v51, %v108
    %v110 = vlaneseq
    %v111 = vshrl.u32 %v110, 7
    %v112 = vsub.s32 4, %v111
    %v113 = vrot.slane %v51, %v112
    %v114 = vlaneseq
    %v115 = vshrl.u32 %v114, 7
    %v116 = vsub.s32 5, %v115
    %v117 = vrot.slane %v51, %v116
    %v118 = vlaneseq
    %v119 = vshrl.u32 %v118, 7
    %v120 = vsub.s32 6, %v119
    %v121 = vrot.slane %v51, %v120
    %v122 = vlaneseq
    %v123 = vshrl.u32 %v122, 7
    %v124 = vsub.s32 7, %v123
    %v125 = vrot.slane %v51, %v124
    %v126 = vlaneseq
    %v127 = vshrl.u32 %v126, 7
    %v128 = vsub.s32 0, %v127
    %v129 = vrot.slane %v52, %v128
    %v130 = vlaneseq
    %v131 = vshrl.u32 %v130, 7
    %v132 = vsub.s32 1, %v131
    %v133 = vrot.slane %v52, %v132
    %v134 = vlaneseq
    %v135 = vshrl.u32 %v134, 7
    %v136 = vsub.s32 2, %v135
    %v137 = vrot.slane %v52, %v136
    %v138 = vlaneseq
    %v139 = vshrl.u32 %v138, 7
    %v140 = vsub.s32 3, %v139
    %v141 = vrot.slane %v52, %v140
    %v142 = vlaneseq
    %v143 = vshrl.u32 %v142, 7
    %v144 = vsub.s32 4, %v143
    %v145 = vrot.slane %v52, %v144
    %v146 = vlaneseq
    %v147 = vshrl.u32 %v146, 7
    %v148 = vsub.s32 5, %v147
    %v149 = vrot.slane %v52, %v148
    %v150 = vlaneseq
    %v151 = vshrl.u32 %v150, 7
    %v152 = vsub.s32 6, %v151
    %v153 = vrot.slane %v52, %v152
    %v154 = vlaneseq
    %v155 = vshrl.u32 %v154, 7
    %v156 = vsub.s32 7, %v155
    %v157 = vrot.slane %v52, %v156
    %v158 = vlaneseq
    %v159 = vshrl.u32 %v158, 7
    %v160 = vsub.s32 0, %v159
    %v161 = vrot.slane %v53, %v160
    %v162 = vlaneseq
    %v163 = vshrl.u32 %v162, 7
    %v164 = vsub.s32 1, %v163
    %v165 = vrot.slane %v53, %v164
    %v166 = vlaneseq
    %v167 = vshrl.u32 %v166, 7
    %v168 = vsub.s32 2, %v167
    %v169 = vrot.slane %v53, %v168
    %v170 = vlaneseq
    %v171 = vshrl.u32 %v170, 7
    %v172 = vsub.s32 3, %v171
    %v173 = vrot.slane %v53, %v172
    %v174 = vlaneseq
    %v175 = vshrl.u32 %v174, 7
    %v176 = vsub.s32 4, %v175
    %v177 = vrot.slane %v53, %v176
    %v178 = vlaneseq
    %v179 = vshrl.u32 %v178, 7
    %v180 = vsub.s32 5, %v179
    %v181 = vrot.slane %v53, %v180
    %v182 = vlaneseq
    %v183 = vshrl.u32 %v182, 7
    %v184 = vsub.s32 6, %v183
    %v185 = vrot.slane %v53, %v184
    %v186 = vlaneseq
    %v187 = vshrl.u32 %v186, 7
    %v188 = vsub.s32 7, %v187
    %v189 = vrot.slane %v53, %v188
    %v190 = vlaneseq
    %v191 = vshrl.u32 %v190, 7
    %v192 = vsub.s32 0, %v191
    %v193 = vrot.slane %v54, %v192
    %v194 = vlaneseq
    %v195 = vshrl.u32 %v194, 7
    %v196 = vsub.s32 1, %v195
    %v197 = vrot.slane %v54, %v196
    %v198 = vlaneseq
    %v199 = vshrl.u32 %v198, 7
    %v200 = vsub.s32 2, %v199
    %v201 = vrot.slane %v54, %v200
    %v202 = vlaneseq
    %v203 = vshrl.u32 %v202, 7
    %v204 = vsub.s32 3, %v203
    %v205 = vrot.slane %v54, %v204
    %v206 = vlaneseq
    %v207 = vshrl.u32 %v206, 7
    %v208 = vsub.s32 4, %v207
    %v209 = vrot.slane %v54, %v208
    %v210 = vlaneseq
    %v211 = vshrl.u32 %v210, 7
    %v212 = vsub.s32 5, %v211
    %v213 = vrot.slane %v54, %v212
    %v214 = vlaneseq
    %v215 = vshrl.u32 %v214, 7
    %v216 = vsub.s32 6, %v215
    %v217 = vrot.slane %v54, %v216
    %v218 = vlaneseq
    %v219 = vshrl.u32 %v218, 7
    %v220 = vsub.s32 7, %v219
    %v221 = vrot.slane %v54, %v220
    %v222 = vlaneseq
    %v223 = vshrl.u32 %v222, 7
    %v224 = vsub.s32 0, %v223
    %v225 = vrot.slane %v55, %v224
    %v226 = vlaneseq
    %v227 = vshrl.u32 %v226, 7
    %v228 = vsub.s32 1, %v227
    %v229 = vrot.slane %v55, %v228
    %v230 = vlaneseq
    %v231 = vshrl.u32 %v230, 7
    %v232 = vsub.s32 2, %v231
    %v233 = vrot.slane %v55, %v232
    %v234 = vlaneseq
    %v235 = vshrl.u32 %v234, 7
    %v236 = vsub.s32 3, %v235
    %v237 = vrot.slane %v55, %v236
    %v238 = vcombine.low %v65, %v69
    %v239 = vcombine.low %v73, %v77
    %v241 = vunpack.c.l.s4 1983009808
    %v242 = vunpack.c.0.s8 %v241
    %v243 = vlaneseq
    %v244 = vshrl.u32 %v243, 7
    %v245 = vsub.s32 %v242, %v244
    %v246 = vrot.slane %v238, %v245
    %v248 = vunpack.c.l.s4 1983009808
    %v249 = vunpack.c.0.s8 %v248
    %v250 = vlaneseq
    %v251 = vshrl.u32 %v250, 7
    %v252 = vsub.s32 %v249, %v251
    %v253 = vrot.slane %v239, %v252
    %v254 = vcombine.low %v246, %v253
    %v255 = vcombine.low %v81, %v85
    %v256 = vcombine.low %v89, %v93
    %v258 = vunpack.c.l.s4 1983009808
    %v259 = vunpack.c.0.s8 %v258
    %v260 = vlaneseq
    %v261 = vshrl.u32 %v260, 7
    %v262 = vsub.s32 %v259, %v261
    %v263 = vrot.slane %v255, %v262
    %v265 = vunpack.c.l.s4 1983009808
    %v266 = vunpack.c.0.s8 %v265
    %v267 = vlaneseq
    %v268 = vshrl.u32 %v267, 7
    %v269 = vsub.s32 %v266, %v268
    %v270 = vrot.slane %v256, %v269
    %v271 = vcombine.low %v263, %v270
    %v272 = vcombine.low %v97, %v101
    %v273 = vcombine.low %v105, %v109
    %v275 = vunpack.c.l.s4 1983009808
    %v276 = vunpack.c.0.s8 %v275
    %v277 = vlaneseq
    %v278 = vshrl.u32 %v277, 7
    %v279 = vsub.s32 %v276, %v278
    %v280 = vrot.slane %v272, %v279
    %v282 = vunpack.c.l.s4 1983009808
    %v283 = vunpack.c.0.s8 %v282
    %v284 = vlaneseq
    %v285 = vshrl.u32 %v284, 7
    %v286 = vsub.s32 %v283, %v285
    %v287 = vrot.slane %v273, %v286
    %v288 = vcombine.low %v280, %v287
    %v289 = vcombine.low %v113, %v117
    %v290 = vcombine.low %v121, %v125
    %v292 = vunpack.c.l.s4 1983009808
    %v293 = vunpack.c.0.s8 %v292
    %v294 = vlaneseq
    %v295 = vshrl.u32 %v294, 7
    %v296 = vsub.s32 %v293, %v295
    %v297 = vrot.slane %v289, %v296
    %v299 = vunpack.c.l.s4 1983009808
    %v300 = vunpack.c.0.s8 %v299
    %v301 = vlaneseq
    %v302 = vshrl.u32 %v301, 7
    %v303 = vsub.s32 %v300, %v302
    %v304 = vrot.slane %v290, %v303
    %v305 = vcombine.low %v297, %v304
    %v306 = vcombine.low %v129, %v133
    %v307 = vcombine.low %v137, %v141
    %v309 = vunpack.c.l.s4 1983009808
    %v310 = vunpack.c.0.s8 %v309
    %v311 = vlaneseq
    %v312 = vshrl.u32 %v311, 7
    %v313 = vsub.s32 %v310, %v312
    %v314 = vrot.slane %v306, %v313
    %v316 = vunpack.c.l.s4 1983009808
    %v317 = vunpack.c.0.s8 %v316
    %v318 = vlaneseq
    %v319 = vshrl.u32 %v318, 7
    %v320 = vsub.s32 %v317, %v319
    %v321 = vrot.slane %v307, %v320
    %v322 = vcombine.low %v314, %v321
    %v323 = vcombine.low %v145, %v149
    %v324 = vcombine.low %v153, %v157
    %v326 = vunpack.c.l.s4 1983009808
    %v327 = vunpack.c.0.s8 %v326
    %v328 = vlaneseq
    %v329 = vshrl.u32 %v328, 7
    %v330 = vsub.s32 %v327, %v329
    %v331 = vrot.slane %v323, %v330
    %v333 = vunpack.c.l.s4 1983009808
    %v334 = vunpack.c.0.s8 %v333
    %v335 = vlaneseq
    %v336 = vshrl.u32 %v335, 7
    %v337 = vsub.s32 %v334, %v336
    %v338 = vrot.slane %v324, %v337
    %v339 = vcombine.low %v331, %v338
    %v340 = vcombine.low %v161, %v165
    %v341 = vcombine.low %v169, %v173
    %v343 = vunpack.c.l.s4 1983009808
    %v344 = vunpack.c.0.s8 %v343
    %v345 = vlaneseq
    %v346 = vshrl.u32 %v345, 7
    %v347 = vsub.s32 %v344, %v346
    %v348 = vrot.slane %v340, %v347
    %v350 = vunpack.c.l.s4 1983009808
    %v351 = vunpack.c.0.s8 %v350
    %v352 = vlaneseq
    %v353 = vshrl.u32 %v352, 7
    %v354 = vsub.s32 %v351, %v353
    %v355 = vrot.slane %v341, %v354
    %v356 = vcombine.low %v348, %v355
    %v357 = vcombine.low %v177, %v181
    %v358 = vcombine.low %v185, %v189
    %v360 = vunpack.c.l.s4 1983009808
    %v361 = vunpack.c.0.s8 %v360
    %v362 = vlaneseq
    %v363 = vshrl.u32 %v362, 7
    %v364 = vsub.s32 %v361, %v363
    %v365 = vrot.slane %v357, %v364
    %v367 = vunpack.c.l.s4 1983009808
    %v368 = vunpack.c.0.s8 %v367
    %v369 = vlaneseq
    %v370 = vshrl.u32 %v369, 7
    %v371 = vsub.s32 %v368, %v370
    %v372 = vrot.slane %v358, %v371
    %v373 = vcombine.low %v365, %v372
    %v374 = vcombine.low %v193, %v197
    %v375 = vcombine.low %v201, %v205
    %v377 = vunpack.c.l.s4 1983009808
    %v378 = vunpack.c.0.s8 %v377
    %v379 = vlaneseq
    %v380 = vshrl.u32 %v379, 7
    %v381 = vsub.s32 %v378, %v380
    %v382 = vrot.slane %v374, %v381
    %v384 = vunpack.c.l.s4 1983009808
    %v385 = vunpack.c.0.s8 %v384
    %v386 = vlaneseq
    %v387 = vshrl.u32 %v386, 7
    %v388 = vsub.s32 %v385, %v387
    %v389 = vrot.slane %v375, %v388
    %v390 = vcombine.low %v382, %v389
    %v391 = vcombine.low %v209, %v213
    %v392 = vcombine.low %v217, %v221
    %v394 = vunpack.c.l.s4 1983009808
    %v395 = vunpack.c.0.s8 %v394
    %v396 = vlaneseq
    %v397 = vshrl.u32 %v396, 7
    %v398 = vsub.s32 %v395, %v397
    %v399 = vrot.slane %v391, %v398
    %v401 = vunpack.c.l.s4 1983009808
    %v402 = vunpack.c.0.s8 %v401
    %v403 = vlaneseq
    %v404 = vshrl.u32 %v403, 7
    %v405 = vsub.s32 %v402, %v404
    %v406 = vrot.slane %v392, %v405
    %v407 = vcombine.low %v399, %v406
    %v408 = vcombine.low %v225, %v229
    %v409 = vcombine.low %v233, %v237
    %v411 = vunpack.c.l.s4 1983009808
    %v412 = vunpack.c.0.s8 %v411
    %v413 = vlaneseq
    %v414 = vshrl.u32 %v413, 7
    %v415 = vsub.s32 %v412, %v414
    %v416 = vrot.slane %v408, %v415
    %v418 = vunpack.c.l.s4 1983009808
    %v419 = vunpack.c.0.s8 %v418
    %v420 = vlaneseq
    %v421 = vshrl.u32 %v420, 7
    %v422 = vsub.s32 %v419, %v421
    %v423 = vrot.slane %v409, %v422
    %v424 = vcombine.low %v416, %v423
    %v436 = vmul.f32 %v39, %v254
    %v437 = vmul.f32 %v40, %v271
    %v438 = vmul.f32 %v41, %v288
    %v439 = vmul.f32 %v42, %v305
    %v440 = vmul.f32 %v43, %v322
    %v441 = vmul.f32 %v44, %v339
    %v442 = vmul.f32 %v45, %v356
    %v443 = vmul.f32 %v46, %v373
    %v444 = vmul.f32 %v47, %v390
    %v445 = vmul.f32 %v48, %v407
    %v446 = vmul.f32 %v49, %v424
    %v458 = vcombine.high %v436, %v436
    %v460 = vunpack.c.l.s4 1983009808
    %v461 = vunpack.c.0.s8 %v460
    %v462 = vlaneseq
    %v463 = vshrl.u32 %v462, 7
    %v464 = vsub.s32 %v461, %v463
    %v465 = vrot.slane %v436, %v464
    %v467 = vunpack.c.l.s4 1983009808
    %v468 = vunpack.c.0.s8 %v467
    %v469 = vlaneseq
    %v470 = vshrl.u32 %v469, 7
    %v471 = vsub.s32 %v468, %v470
    %v472 = vrot.slane %v458, %v471
    %v473 = vcombine.high %v465, %v465
    %v474 = vcombine.high %v472, %v472
    %v475 = vcombine.high %v437, %v437
    %v477 = vunpack.c.l.s4 1983009808
    %v478 = vunpack.c.0.s8 %v477
    %v479 = vlaneseq
    %v480 = vshrl.u32 %v479, 7
    %v481 = vsub.s32 %v478, %v480
    %v482 = vrot.slane %v437, %v481
    %v484 = vunpack.c.l.s4 1983009808
    %v485 = vunpack.c.0.s8 %v484
    %v486 = vlaneseq
    %v487 = vshrl.u32 %v486, 7
    %v488 = vsub.s32 %v485, %v487
    %v489 = vrot.slane %v475, %v488
    %v490 = vcombine.high %v482, %v482
    %v491 = vcombine.high %v489, %v489
    %v492 = vcombine.high %v438, %v438
    %v494 = vunpack.c.l.s4 1983009808
    %v495 = vunpack.c.0.s8 %v494
    %v496 = vlaneseq
    %v497 = vshrl.u32 %v496, 7
    %v498 = vsub.s32 %v495, %v497
    %v499 = vrot.slane %v438, %v498
    %v501 = vunpack.c.l.s4 1983009808
    %v502 = vunpack.c.0.s8 %v501
    %v503 = vlaneseq
    %v504 = vshrl.u32 %v503, 7
    %v505 = vsub.s32 %v502, %v504
    %v506 = vrot.slane %v492, %v505
    %v507 = vcombine.high %v499, %v499
    %v508 = vcombine.high %v506, %v506
    %v509 = vcombine.high %v439, %v439
    %v511 = vunpack.c.l.s4 1983009808
    %v512 = vunpack.c.0.s8 %v511
    %v513 = vlaneseq
    %v514 = vshrl.u32 %v513, 7
    %v515 = vsub.s32 %v512, %v514
    %v516 = vrot.slane %v439, %v515
    %v518 = vunpack.c.l.s4 1983009808
    %v519 = vunpack.c.0.s8 %v518
    %v520 = vlaneseq
    %v521 = vshrl.u32 %v520, 7
    %v522 = vsub.s32 %v519, %v521
    %v523 = vrot.slane %v509, %v522
    %v524 = vcombine.high %v516, %v516
    %v525 = vcombine.high %v523, %v523
    %v526 = vcombine.high %v440, %v440
    %v528 = vunpack.c.l.s4 1983009808
    %v529 = vunpack.c.0.s8 %v528
    %v530 = vlaneseq
    %v531 = vshrl.u32 %v530, 7
    %v532 = vsub.s32 %v529, %v531
    %v533 = vrot.slane %v440, %v532
    %v535 = vunpack.c.l.s4 1983009808
    %v536 = vunpack.c.0.s8 %v535
    %v537 = vlaneseq
    %v538 = vshrl.u32 %v537, 7
    %v539 = vsub.s32 %v536, %v538
    %v540 = vrot.slane %v526, %v539
    %v541 = vcombine.high %v533, %v533
    %v542 = vcombine.high %v540, %v540
    %v543 = vcombine.high %v441, %v441
    %v545 = vunpack.c.l.s4 1983009808
    %v546 = vunpack.c.0.s8 %v545
    %v547 = vlaneseq
    %v548 = vshrl.u32 %v547, 7
    %v549 = vsub.s32 %v546, %v548
    %v550 = vrot.slane %v441, %v549
    %v552 = vunpack.c.l.s4 1983009808
    %v553 = vunpack.c.0.s8 %v552
    %v554 = vlaneseq
    %v555 = vshrl.u32 %v554, 7
    %v556 = vsub.s32 %v553, %v555
    %v557 = vrot.slane %v543, %v556
    %v558 = vcombine.high %v550, %v550
    %v559 = vcombine.high %v557, %v557
    %v560 = vcombine.high %v442, %v442
    %v562 = vunpack.c.l.s4 1983009808
    %v563 = vunpack.c.0.s8 %v562
    %v564 = vlaneseq
    %v565 = vshrl.u32 %v564, 7
    %v566 = vsub.s32 %v563, %v565
    %v567 = vrot.slane %v442, %v566
    %v569 = vunpack.c.l.s4 1983009808
    %v570 = vunpack.c.0.s8 %v569
    %v571 = vlaneseq
    %v572 = vshrl.u32 %v571, 7
    %v573 = vsub.s32 %v570, %v572
    %v574 = vrot.slane %v560, %v573
    %v575 = vcombine.high %v567, %v567
    %v576 = vcombine.high %v574, %v574
    %v577 = vcombine.high %v443, %v443
    %v579 = vunpack.c.l.s4 1983009808
    %v580 = vunpack.c.0.s8 %v579
    %v581 = vlaneseq
    %v582 = vshrl.u32 %v581, 7
    %v583 = vsub.s32 %v580, %v582
    %v584 = vrot.slane %v443, %v583
    %v586 = vunpack.c.l.s4 1983009808
    %v587 = vunpack.c.0.s8 %v586
    %v588 = vlaneseq
    %v589 = vshrl.u32 %v588, 7
    %v590 = vsub.s32 %v587, %v589
    %v591 = vrot.slane %v577, %v590
    %v592 = vcombine.high %v584, %v584
    %v593 = vcombine.high %v591, %v591
    %v594 = vcombine.high %v444, %v444
    %v596 = vunpack.c.l.s4 1983009808
    %v597 = vunpack.c.0.s8 %v596
    %v598 = vlaneseq
    %v599 = vshrl.u32 %v598, 7
    %v600 = vsub.s32 %v597, %v599
    %v601 = vrot.slane %v444, %v600
    %v603 = vunpack.c.l.s4 1983009808
    %v604 = vunpack.c.0.s8 %v603
    %v605 = vlaneseq
    %v606 = vshrl.u32 %v605, 7
    %v607 = vsub.s32 %v604, %v606
    %v608 = vrot.slane %v594, %v607
    %v609 = vcombine.high %v601, %v601
    %v610 = vcombine.high %v608, %v608
    %v611 = vcombine.high %v445, %v445
    %v613 = vunpack.c.l.s4 1983009808
    %v614 = vunpack.c.0.s8 %v613
    %v615 = vlaneseq
    %v616 = vshrl.u32 %v615, 7
    %v617 = vsub.s32 %v614, %v616
    %v618 = vrot.slane %v445, %v617
    %v620 = vunpack.c.l.s4 1983009808
    %v621 = vunpack.c.0.s8 %v620
    %v622 = vlaneseq
    %v623 = vshrl.u32 %v622, 7
    %v624 = vsub.s32 %v621, %v623
    %v625 = vrot.slane %v611, %v624
    %v626 = vcombine.high %v618, %v618
    %v627 = vcombine.high %v625, %v625
    %v628 = vcombine.high %v446, %v446
    %v630 = vunpack.c.l.s4 1983009808
    %v631 = vunpack.c.0.s8 %v630
    %v632 = vlaneseq
    %v633 = vshrl.u32 %v632, 7
    %v634 = vsub.s32 %v631, %v633
    %v635 = vrot.slane %v446, %v634
    %v637 = vunpack.c.l.s4 1983009808
    %v638 = vunpack.c.0.s8 %v637
    %v639 = vlaneseq
    %v640 = vshrl.u32 %v639, 7
    %v641 = vsub.s32 %v638, %v640
    %v642 = vrot.slane %v628, %v641
    %v643 = vcombine.high %v635, %v635
    %v644 = vcombine.high %v642, %v642
    %vm689 = vcmask 1041408
    %v690 = vsel %vm689, %v465, 0.0
    %v691 = vsel %vm689, %v473, 0.0
    %v692 = vadd.f32 %v690, %v691
    %v693 = vsel %vm689, %v472, 0.0
    %v694 = vadd.f32 %v692, %v693
    %v695 = vsel %vm689, %v474, 0.0
    %v696 = vadd.f32 %v694, %v695
    %v697 = vsel %vm689, %v482, 0.0
    %v698 = vadd.f32 %v696, %v697
    %v699 = vsel %vm689, %v490, 0.0
    %v700 = vadd.f32 %v698, %v699
    %v701 = vsel %vm689, %v489, 0.0
    %v702 = vadd.f32 %v700, %v701
    %v703 = vsel %vm689, %v491, 0.0
    %v704 = vadd.f32 %v702, %v703
    %v705 = vsel %vm689, %v499, 0.0
    %v706 = vadd.f32 %v704, %v705
    %v707 = vsel %vm689, %v507, 0.0
    %v708 = vadd.f32 %v706, %v707
    %v709 = vsel %vm689, %v506, 0.0
    %v710 = vadd.f32 %v708, %v709
    %v711 = vsel %vm689, %v508, 0.0
    %v712 = vadd.f32 %v710, %v711
    %v713 = vsel %vm689, %v516, 0.0
    %v714 = vadd.f32 %v712, %v713
    %v715 = vsel %vm689, %v524, 0.0
    %v716 = vadd.f32 %v714, %v715
    %v717 = vsel %vm689, %v523, 0.0
    %v718 = vadd.f32 %v716, %v717
    %v719 = vsel %vm689, %v525, 0.0
    %v720 = vadd.f32 %v718, %v719
    %v721 = vsel %vm689, %v533, 0.0
    %v722 = vadd.f32 %v720, %v721
    %v723 = vsel %vm689, %v541, 0.0
    %v724 = vadd.f32 %v722, %v723
    %v725 = vsel %vm689, %v540, 0.0
    %v726 = vadd.f32 %v724, %v725
    %v727 = vsel %vm689, %v542, 0.0
    %v728 = vadd.f32 %v726, %v727
    %v729 = vsel %vm689, %v550, 0.0
    %v730 = vadd.f32 %v728, %v729
    %v731 = vsel %vm689, %v558, 0.0
    %v732 = vadd.f32 %v730, %v731
    %v733 = vsel %vm689, %v557, 0.0
    %v734 = vadd.f32 %v732, %v733
    %v735 = vsel %vm689, %v559, 0.0
    %v736 = vadd.f32 %v734, %v735
    %v737 = vsel %vm689, %v567, 0.0
    %v738 = vadd.f32 %v736, %v737
    %v739 = vsel %vm689, %v575, 0.0
    %v740 = vadd.f32 %v738, %v739
    %v741 = vsel %vm689, %v574, 0.0
    %v742 = vadd.f32 %v740, %v741
    %v743 = vsel %vm689, %v576, 0.0
    %v744 = vadd.f32 %v742, %v743
    %v745 = vsel %vm689, %v584, 0.0
    %v746 = vadd.f32 %v744, %v745
    %v747 = vsel %vm689, %v592, 0.0
    %v748 = vadd.f32 %v746, %v747
    %v749 = vsel %vm689, %v591, 0.0
    %v750 = vadd.f32 %v748, %v749
    %v751 = vsel %vm689, %v593, 0.0
    %v752 = vadd.f32 %v750, %v751
    %v753 = vsel %vm689, %v601, 0.0
    %v754 = vadd.f32 %v752, %v753
    %v755 = vsel %vm689, %v609, 0.0
    %v756 = vadd.f32 %v754, %v755
    %v757 = vsel %vm689, %v608, 0.0
    %v758 = vadd.f32 %v756, %v757
    %v759 = vsel %vm689, %v610, 0.0
    %v760 = vadd.f32 %v758, %v759
    %v761 = vsel %vm689, %v618, 0.0
    %v762 = vadd.f32 %v760, %v761
    %v763 = vsel %vm689, %v626, 0.0
    %v764 = vadd.f32 %v762, %v763
    %v765 = vsel %vm689, %v625, 0.0
    %v766 = vadd.f32 %v764, %v765
    %v767 = vsel %vm689, %v627, 0.0
    %v768 = vadd.f32 %v766, %v767
    %v769 = vsel %vm689, %v635, 0.0
    %v770 = vadd.f32 %v768, %v769
    %v771 = vsel %vm689, %v643, 0.0
    %v772 = vadd.f32 %v770, %v771
    %v773 = vsel %vm689, %v642, 0.0
    %v774 = vadd.f32 %v772, %v773
    %vm775 = vcmask 984064
    %v776 = vsel %vm775, %v644, 0.0
    %v777 = vadd.f32 %v774, %v776
    %778 = vadd.xlane.f32.xlu0 %v777
    %v779 = vpop.xlane.xlu0 %778
    %s780 = sld [smem:[#allocation2]]
    %v781 = vstv %s780
    %v782 = vadd.f32 %v779, %v781
    %vm783 = vcmask 1024
    %784 = vst.msk [vmem:[%s3] sm:$0x3] %vm783, %v782
    // Predicated region
    $region22: #{tpu_custom_call.1} parent=1 // pred_check
      _
    $region23: #{tpu_custom_call.1} parent=1 // pred_check_branch
      %786 = sbr.rel (0) target = $region25
    $region24: #{tpu_custom_call.1} parent=1 // pred_region
      _
    $region25: #{tpu_custom_call.1} parent=1 // pred_fallthru
      _
    // Predicated region
    $region26: #{tpu_custom_call.1} parent=1 // pred_check
      _
    $region27: #{tpu_custom_call.1} parent=1 // pred_check_branch
      %788 = sbr.rel (0) target = $region29
    $region28: #{tpu_custom_call.1} parent=1 // pred_region
      _
    $region29: #{tpu_custom_call.1} parent=1 // pred_fallthru
      _
    %789 = vsyncpa [#allocation4], 1
    %790 = vsyncpa [#allocation6], 1

</llo_original>
